<compile_context>
chip_gen: v5e
topology: v5e:2x2
jax: 0.10.0
libtpu: 0.0.40
codegen_flags: <defaults>
</compile_context>

<pallas_src>
import jax
import jax.numpy as jnp
from jax.experimental import pallas as pl
from jax.experimental.pallas import tpu as pltpu

DIM = 211          # args.dim
N_EXPERTS = 100    # args.n_routed_experts
TOPK = 2           # args.n_activated_experts
ROUTE_SCALE = 1.0  # args.route_scale
TOKEN_TILE = 1024  # token-axis tile (~0.9 MB x-block; tiny vs any VMEM budget)


def _round_up(x: int, m: int) -> int:
    return (x + m - 1) // m * m


def gate_kernel(x_ref, w_ref, b_ref, out_ref):
    x = x_ref[...]                                   # (Tt, D)   f32
    w = w_ref[...]                                   # (D,  Ep)  f32 (resident)
    b = b_ref[...]                                   # (1,  Ep)  f32 (resident; -inf in padded lanes)

    # Linear (f32 MXU, f32 accumulation) + bias; padded lanes get -inf logits.
    logits = jnp.dot(x, w, preferred_element_type=jnp.float32) + b
    # score_func == 'sigmoid' (eval path: no load-balancing division)
    scores = jax.nn.sigmoid(logits)                  # padded lanes -> exactly 0

    col = jax.lax.broadcasted_iota(jnp.int32, scores.shape, 1)
    big = jnp.int32(2 ** 30)
    neg_inf = jnp.float32(-jnp.inf)

    # top-1 (first occurrence on ties, like torch.topk; real experts have the
    # smallest column indices so padded zero-columns can never be selected)
    v1 = jnp.max(scores, axis=-1, keepdims=True)
    i1 = jnp.min(jnp.where(scores == v1, col, big), axis=-1, keepdims=True)
    # top-2
    masked2 = jnp.where(col == i1, neg_inf, scores)
    v2 = jnp.max(masked2, axis=-1, keepdims=True)
    i2 = jnp.min(jnp.where(masked2 == v2, col, big), axis=-1, keepdims=True)

    # sigmoid branch: normalize the gathered top-k weights, then route_scale
    denom = v1 + v2
    w1 = (v1 / denom) * ROUTE_SCALE
    w2 = (v2 / denom) * ROUTE_SCALE

    # compact per-token packing: lanes = [w1, w2, float(i1), float(i2)]
    # (indices < 128 are exactly representable in f32, so plain casts round-trip)
    lane = jax.lax.broadcasted_iota(jnp.int32, (v1.shape[0], 2 * TOPK), 1)
    out_ref[...] = jnp.where(
        lane == 0, w1,
        jnp.where(lane == 1, w2,
                  jnp.where(lane == 2, i1.astype(jnp.float32),
                            i2.astype(jnp.float32))))


def prepare_gate_params(w: jax.Array, b: jax.Array):
    """One-time parameter prep (do at model init, NOT per call).

    w: [D, E] f32  (transposed vs PyTorch nn.Linear's [E, D])
    b: [E]    f32
    Returns (wp [D, Ep] f32, bp [1, Ep] f32) with Ep = round_up(E, 128);
    bias lanes >= E are -inf so padded experts can never be selected.
    """
    D, E = w.shape
    Ep = _round_up(E, 128)
    wp = jnp.zeros((D, Ep), jnp.float32).at[:, :E].set(w.astype(jnp.float32))
    bp = jnp.full((1, Ep), -jnp.inf, jnp.float32).at[0, :E].set(
        b.astype(jnp.float32))
    return wp, bp


def gate_forward(x: jax.Array, wp: jax.Array, bp: jax.Array):
    """x: [T, D], wp: [D, Ep] f32, bp: [1, Ep] f32
       -> (weights [T, 2] x.dtype, indices [T, 2] i32)."""
    T, D = x.shape
    Ep = wp.shape[1]

    # Token tile: multiple of 8 (or == T), capped at TOKEN_TILE, and chosen so the
    # grid has >= 2 steps when T is large enough (lets v7x's 2 TCs split it).
    if T >= 16:
        tile_t = min(TOKEN_TILE, _round_up(pl.cdiv(T, 2), 8))
    else:
        tile_t = T
    grid = (pl.cdiv(T, tile_t),)

    packed = pl.pallas_call(
        gate_kernel,
        out_shape=jax.ShapeDtypeStruct((T, 2 * TOPK), jnp.float32),
        grid=grid,
        in_specs=[
            # x: last dim equals the full array dim D (211); token axis tiled,
            # ragged last block allowed (no cross-row reductions in the kernel)
            pl.BlockSpec((tile_t, D), lambda i: (i, 0)),
            # weight / bias stay resident across the token grid
            pl.BlockSpec((D, Ep), lambda i: (0, 0)),
            pl.BlockSpec((1, Ep), lambda i: (0, 0)),
        ],
        # compact output: 4 lanes/token (== full array last dim), contiguous in HBM
        out_specs=pl.BlockSpec((tile_t, 2 * TOPK), lambda i: (i, 0)),
        compiler_params=pltpu.CompilerParams(
            dimension_semantics=("parallel",)),
    )(x, wp, bp)

    weights = packed[:, :TOPK].astype(x.dtype)          # weights.type_as(x)
    indices = packed[:, TOPK:].astype(jnp.int32)
    return weights, indices


if __name__ == "__main__":
    key = jax.random.PRNGKey(0)
    kx, kw, kb = jax.random.split(key, 3)

    T = 8  # small token batch
    x = jax.random.normal(kx, (T, DIM), jnp.float32)

    # Deterministic nn.Linear-style init: U(-1/sqrt(dim), 1/sqrt(dim))
    bound = 1.0 / (DIM ** 0.5)
    w = jax.random.uniform(kw, (DIM, N_EXPERTS), jnp.float32, -bound, bound)
    b = jax.random.uniform(kb, (N_EXPERTS,), jnp.float32, -bound, bound)

    # one-time parameter prep (hoisted out of the forward call)
    wp, bp = prepare_gate_params(w, b)

    fwd = jax.jit(gate_forward)
    weights, indices = fwd(x, wp, bp)
    jax.block_until_ready((weights, indices))

    # pure-JAX f32 reference
    ref_scores = jax.nn.sigmoid(
        jnp.dot(x, w, precision=jax.lax.Precision.HIGHEST) + b)
    ref_vals, ref_idx = jax.lax.top_k(ref_scores, TOPK)
    ref_wts = ref_vals / ref_vals.sum(axis=-1, keepdims=True) * ROUTE_SCALE

    assert weights.shape == (T, TOPK) and indices.shape == (T, TOPK)
    assert jnp.array_equal(indices, ref_idx.astype(jnp.int32)), "index mismatch"
    assert jnp.allclose(weights, ref_wts, atol=1e-4, rtol=1e-4), "weight mismatch"

    # TODO(synk): training-mode load-balancing (scores / expert_percentages) and the
    # expert_activation_counts side-effect buffers are host/training state, not
    # implemented in this eval-path kernel.
    print("KERNEL_OK")
</pallas_src>

<mosaic_0001>
module attributes {stable_mosaic.version = 11 : i64} {
  func.func @gate_kernel(%arg0: i32, %arg1: memref<8x211xf32, #tpu.memory_space<vmem>>, %arg2: memref<211x128xf32, #tpu.memory_space<vmem>>, %arg3: memref<1x128xf32, #tpu.memory_space<vmem>>, %arg4: memref<8x4xf32, #tpu.memory_space<vmem>>) attributes {dimension_semantics = [#tpu.dimension_semantics<parallel>], iteration_bounds = array<i64: 1>, scalar_prefetch = 0 : i64, scratch_operands = 0 : i64, tpu.core_type = #tpu.core_type<tc>, window_params = [{transform_indices = @transform_0, window_bounds = array<i64: 8, 211>}, {pipeline_mode = #tpu.pipeline_mode<synchronous>, transform_indices = @transform_1, window_bounds = array<i64: 211, 128>}, {pipeline_mode = #tpu.pipeline_mode<synchronous>, transform_indices = @transform_2, window_bounds = array<i64: 1, 128>}, {transform_indices = @transform_3, window_bounds = array<i64: 8, 4>}]} {
    %c0 = arith.constant 0 : index
    %c0_0 = arith.constant 0 : index
    %0 = vector.load %arg1[%c0, %c0_0] : memref<8x211xf32, #tpu.memory_space<vmem>>, vector<8x211xf32>
    %c0_1 = arith.constant 0 : index
    %c0_2 = arith.constant 0 : index
    %1 = vector.load %arg2[%c0_1, %c0_2] : memref<211x128xf32, #tpu.memory_space<vmem>>, vector<211x128xf32>
    %c0_3 = arith.constant 0 : index
    %c0_4 = arith.constant 0 : index
    %2 = vector.load %arg3[%c0_3, %c0_4] : memref<1x128xf32, #tpu.memory_space<vmem>>, vector<1x128xf32>
    %cst = arith.constant dense<0.000000e+00> : vector<8x128xf32>
    %3 = tpu.matmul %0, %1, %cst {dimension_numbers = #tpu.dot_dimension_numbers<[1], [0], [0], [1], [0, 0, 1, 1], [], []>} : vector<8x211xf32>, vector<211x128xf32>, vector<8x128xf32> -> vector<8x128xf32>
    %4 = vector.broadcast %2 : vector<1x128xf32> to vector<8x128xf32>
    %5 = arith.addf %3, %4 : vector<8x128xf32>
    %6 = arith.negf %5 : vector<8x128xf32>
    %7 = math.exp %6 : vector<8x128xf32>
    %cst_5 = arith.constant 1.000000e+00 : f32
    %8 = vector.broadcast %cst_5 : f32 to vector<8x128xf32>
    %9 = arith.addf %8, %7 : vector<8x128xf32>
    %10 = arith.divf %8, %9 : vector<8x128xf32>
    %11 = tpu.iota {dimensions = array<i32: 1>} : vector<8x128xi32>
    %cst_6 = arith.constant dense<0xFF800000> : vector<8xf32>
    %12 = vector.multi_reduction <maximumf>, %10, %cst_6 [1] : vector<8x128xf32> to vector<8xf32>
    %13 = vector.shape_cast %12 : vector<8xf32> to vector<8x1xf32>
    %14 = vector.broadcast %13 : vector<8x1xf32> to vector<8x128xf32>
    %15 = arith.cmpf oeq, %10, %14 : vector<8x128xf32>
    %c1073741824_i32 = arith.constant 1073741824 : i32
    %16 = vector.broadcast %c1073741824_i32 : i32 to vector<8x128xi32>
    %17 = arith.select %15, %11, %16 : vector<8x128xi1>, vector<8x128xi32>
    %cst_7 = arith.constant dense<2147483647> : vector<8xi32>
    %18 = vector.multi_reduction <minsi>, %17, %cst_7 [1] : vector<8x128xi32> to vector<8xi32>
    %19 = vector.shape_cast %18 : vector<8xi32> to vector<8x1xi32>
    %20 = vector.broadcast %19 : vector<8x1xi32> to vector<8x128xi32>
    %21 = arith.cmpi eq, %11, %20 : vector<8x128xi32>
    %cst_8 = arith.constant 0xFF800000 : f32
    %22 = vector.broadcast %cst_8 : f32 to vector<8x128xf32>
    %23 = arith.select %21, %22, %10 : vector<8x128xi1>, vector<8x128xf32>
    %cst_9 = arith.constant dense<0xFF800000> : vector<8xf32>
    %24 = vector.multi_reduction <maximumf>, %23, %cst_9 [1] : vector<8x128xf32> to vector<8xf32>
    %25 = vector.shape_cast %24 : vector<8xf32> to vector<8x1xf32>
    %26 = vector.broadcast %25 : vector<8x1xf32> to vector<8x128xf32>
    %27 = arith.cmpf oeq, %23, %26 : vector<8x128xf32>
    %c1073741824_i32_10 = arith.constant 1073741824 : i32
    %28 = vector.broadcast %c1073741824_i32_10 : i32 to vector<8x128xi32>
    %29 = arith.select %27, %11, %28 : vector<8x128xi1>, vector<8x128xi32>
    %cst_11 = arith.constant dense<2147483647> : vector<8xi32>
    %30 = vector.multi_reduction <minsi>, %29, %cst_11 [1] : vector<8x128xi32> to vector<8xi32>
    %31 = vector.shape_cast %30 : vector<8xi32> to vector<8x1xi32>
    %32 = arith.addf %13, %25 : vector<8x1xf32>
    %33 = arith.divf %13, %32 : vector<8x1xf32>
    %cst_12 = arith.constant 1.000000e+00 : f32
    %34 = vector.broadcast %cst_12 : f32 to vector<8x1xf32>
    %35 = arith.mulf %33, %34 : vector<8x1xf32>
    %36 = arith.divf %25, %32 : vector<8x1xf32>
    %cst_13 = arith.constant 1.000000e+00 : f32
    %37 = vector.broadcast %cst_13 : f32 to vector<8x1xf32>
    %38 = arith.mulf %36, %37 : vector<8x1xf32>
    %39 = tpu.iota {dimensions = array<i32: 1>} : vector<8x4xi32>
    %c0_i32 = arith.constant 0 : i32
    %40 = vector.broadcast %c0_i32 : i32 to vector<8x4xi32>
    %41 = arith.cmpi eq, %39, %40 : vector<8x4xi32>
    %c1_i32 = arith.constant 1 : i32
    %42 = vector.broadcast %c1_i32 : i32 to vector<8x4xi32>
    %43 = arith.cmpi eq, %39, %42 : vector<8x4xi32>
    %c2_i32 = arith.constant 2 : i32
    %44 = vector.broadcast %c2_i32 : i32 to vector<8x4xi32>
    %45 = arith.cmpi eq, %39, %44 : vector<8x4xi32>
    %46 = arith.sitofp %19 : vector<8x1xi32> to vector<8x1xf32>
    %47 = arith.sitofp %31 : vector<8x1xi32> to vector<8x1xf32>
    %48 = vector.shape_cast %46 : vector<8x1xf32> to vector<8x1xf32>
    %49 = vector.broadcast %48 : vector<8x1xf32> to vector<8x4xf32>
    %50 = vector.shape_cast %47 : vector<8x1xf32> to vector<8x1xf32>
    %51 = vector.broadcast %50 : vector<8x1xf32> to vector<8x4xf32>
    %52 = arith.select %45, %49, %51 : vector<8x4xi1>, vector<8x4xf32>
    %53 = vector.shape_cast %38 : vector<8x1xf32> to vector<8x1xf32>
    %54 = vector.broadcast %53 : vector<8x1xf32> to vector<8x4xf32>
    %55 = arith.select %43, %54, %52 : vector<8x4xi1>, vector<8x4xf32>
    %56 = vector.shape_cast %35 : vector<8x1xf32> to vector<8x1xf32>
    %57 = vector.broadcast %56 : vector<8x1xf32> to vector<8x4xf32>
    %58 = arith.select %41, %57, %55 : vector<8x4xi1>, vector<8x4xf32>
    %c0_14 = arith.constant 0 : index
    %c0_15 = arith.constant 0 : index
    %59 = vector.load %arg4[%c0_14, %c0_15] : memref<8x4xf32, #tpu.memory_space<vmem>>, vector<8x4xf32>
    tpu.vector_store %arg4[%c0_14, %c0_15], %58 {strides = array<i32>} : memref<8x4xf32, #tpu.memory_space<vmem>>, vector<8x4xf32>,
    return
  }
  func.func @transform_0(%arg0: i32) -> (i32, i32) {
    %c0_i32 = arith.constant 0 : i32
    %c0_i32_0 = arith.constant 0 : i32
    return %arg0, %c0_i32 : i32, i32
  }
  func.func @transform_1(%arg0: i32) -> (i32, i32) {
    %c0_i32 = arith.constant 0 : i32
    %c0_i32_0 = arith.constant 0 : i32
    %c0_i32_1 = arith.constant 0 : i32
    return %c0_i32, %c0_i32_0 : i32, i32
  }
  func.func @transform_2(%arg0: i32) -> (i32, i32) {
    %c0_i32 = arith.constant 0 : i32
    %c0_i32_0 = arith.constant 0 : i32
    %c0_i32_1 = arith.constant 0 : i32
    return %c0_i32, %c0_i32_0 : i32, i32
  }
  func.func @transform_3(%arg0: i32) -> (i32, i32) {
    %c0_i32 = arith.constant 0 : i32
    %c0_i32_0 = arith.constant 0 : i32
    return %arg0, %c0_i32 : i32, i32
  }
}

</mosaic_0001>

<llo_original>
// kernel: gate_forward.1
$region0: #{gate_forward.1}
  #allocation0 [shape = 'u32[]', space=smem, size = 0x4, offset = 0x4, fixed_abs, tag = 'smem constant byte address 0x4 - core index']
  #allocation1 [shape = 'u32[72,128]{1,0:T(1,128)}', space=vmem, size = 0x9000, scoped, tag = 'internal scratch']
  %s0 = inlined_call_operand.hbm [shape: f32[8,211], index: 0, kind: input, shape index: {}]
  %s1 = inlined_call_operand.hbm [shape: f32[211,128], index: 1, kind: input, shape index: {}]
  %s2 = inlined_call_operand.vmem [shape: f32[1,128], index: 2, kind: input, shape index: {}]
  %s3 = inlined_call_operand.vmem [shape: f32[8,4], index: 3, kind: output, shape index: {}]
  %s4 = sld [smem:[#allocation0]]
  $region30: #{gate_forward.1} parent=0
    _
  %s6 = ssub.s32 1, %s4
  %s7 = scalar_select 0, %s6, %s4
  $region1: #{gate_forward.1} parent=0
    #allocation2 [shape = 'u8[8192]{0}', space=vmem, size = 0x2000, scoped, tag = 'input window, operand 0, single buffered']
    #allocation3 [shape = 's32[1]{0}', space=sflag, size = 0x4, scoped, tag = 'scoped memory for gate_forward.1']
    #allocation4 [shape = 'u8[110592]{0}', space=vmem, size = 0x1b000, scoped, tag = 'input window, operand 1, single buffered']
    #allocation5 [shape = 's32[1]{0}', space=sflag, size = 0x4, scoped, tag = 'scoped memory for gate_forward.1']
    %8 = vsyncpa [#allocation3], 0
    %9 = vsyncpa [#allocation5], 0
    // Predicated region
    $region2: #{gate_forward.1} parent=1 // pred_check
      _
    $region3: #{gate_forward.1} parent=1 // pred_check_branch
      %11 = sbr.rel (0) target = $region5
    $region4: #{gate_forward.1} parent=1 // pred_region
      %13 = vsyncadd [#allocation3], 0
      %s15 = sshll.u32 %s0, 4
      %s16 = int_to_ptr.hbm [resolvable:$true] %s15
      %s17 = sshll.u32 [#allocation2], 4
      %s18 = int_to_ptr.vmem [resolvable:$true] %s17
      %20 = dma.hbm_to_vmem [thread:$0]  %s16, 256, %s18, [#allocation3]
    $region5: #{gate_forward.1} parent=1 // pred_fallthru
      _
    // Predicated region
    $region6: #{gate_forward.1} parent=1 // pred_check
      _
    $region7: #{gate_forward.1} parent=1 // pred_check_branch
      %22 = sbr.rel (0) target = $region9
    $region8: #{gate_forward.1} parent=1 // pred_region
      %24 = vsyncadd [#allocation5], 0
      %s25 = sshll.u32 %s1, 4
      %s26 = int_to_ptr.hbm [resolvable:$true] %s25
      %s27 = sshll.u32 [#allocation4], 4
      %s28 = int_to_ptr.vmem [resolvable:$true] %s27
      %33 = dma.hbm_to_vmem [thread:$0]  %s26, 3456, %s28, [#allocation5], 128, 128, 8
    $region9: #{gate_forward.1} parent=1 // pred_fallthru
      _
    // Predicated region
    $region10: #{gate_forward.1} parent=1 // pred_check
      _
    $region11: #{gate_forward.1} parent=1 // pred_check_branch
      %35 = sbr.rel (0) target = $region13
    $region12: #{gate_forward.1} parent=1 // pred_region
      _
    $region13: #{gate_forward.1} parent=1 // pred_fallthru
      _
    // Predicated region
    $region14: #{gate_forward.1} parent=1 // pred_check
      _
    $region15: #{gate_forward.1} parent=1 // pred_check_branch
      %37 = sbr.rel (0) target = $region17
    $region16: #{gate_forward.1} parent=1 // pred_region
      %39 = dma.done [#allocation3], 256
    $region17: #{gate_forward.1} parent=1 // pred_fallthru
      _
    // Predicated region
    $region18: #{gate_forward.1} parent=1 // pred_check
      _
    $region19: #{gate_forward.1} parent=1 // pred_check_branch
      %41 = sbr.rel (0) target = $region21
    $region20: #{gate_forward.1} parent=1 // pred_region
      %43 = dma.done [#allocation5], 3456
    $region21: #{gate_forward.1} parent=1 // pred_fallthru
      _
    %v44 = vld [vmem:[#allocation2] sm:$0xff]
    %v45 = vld [vmem:[#allocation2 + $0x8] sm:$0xff]
    %v46 = vld [vmem:[#allocation4] sm:$0xff]
    %v47 = vld [vmem:[#allocation4 + $0x8] sm:$0xff]
    %v48 = vld [vmem:[#allocation4 + $0x10] sm:$0xff]
    %v49 = vld [vmem:[#allocation4 + $0x18] sm:$0xff]
    %v50 = vld [vmem:[#allocation4 + $0x20] sm:$0xff]
    %v51 = vld [vmem:[#allocation4 + $0x28] sm:$0xff]
    %v52 = vld [vmem:[#allocation4 + $0x30] sm:$0xff]
    %v53 = vld [vmem:[#allocation4 + $0x38] sm:$0xff]
    %v54 = vld [vmem:[#allocation4 + $0x40] sm:$0xff]
    %v55 = vld [vmem:[#allocation4 + $0x48] sm:$0xff]
    %v56 = vld [vmem:[#allocation4 + $0x50] sm:$0xff]
    %v57 = vld [vmem:[#allocation4 + $0x58] sm:$0xff]
    %v58 = vld [vmem:[#allocation4 + $0x60] sm:$0xff]
    %v59 = vld [vmem:[#allocation4 + $0x68] sm:$0xff]
    %v60 = vld [vmem:[#allocation4 + $0x70] sm:$0xff]
    %v61 = vld [vmem:[#allocation4 + $0x78] sm:$0xff]
    %v62 = vld [vmem:[#allocation4 + $0x80] sm:$0xff]
    %v63 = vld [vmem:[#allocation4 + $0x88] sm:$0xff]
    %v64 = vld [vmem:[#allocation4 + $0x90] sm:$0xff]
    %v65 = vld [vmem:[#allocation4 + $0x98] sm:$0xff]
    %v66 = vld [vmem:[#allocation4 + $0xa0] sm:$0xff]
    %v67 = vld [vmem:[#allocation4 + $0xa8] sm:$0xff]
    %v68 = vld [vmem:[#allocation4 + $0xb0] sm:$0xff]
    %v69 = vld [vmem:[#allocation4 + $0xb8] sm:$0xff]
    %v70 = vld [vmem:[#allocation4 + $0xc0] sm:$0xff]
    %v71 = vld [vmem:[#allocation4 + $0xc8] sm:$0xff]
    %v72 = vld [vmem:[#allocation4 + $0xd0] sm:$0x7]
    %v73 = vld [vmem:[%s2] sm:$0x1]
    %v75 = vperm.slane %v73, 0
    %vm77 = vcmask 678912
    %v79 = vsel %vm77, %v45, 0
    %vm81 = vcmask 1042432
    %v83 = vsel %vm81, %v72, 0
    %85 = vmatpush.msra.mxu0 %v61
    %86 = vmatpush.msra.mxu0 %v60
    %87 = vmatpush.msra.mxu0 %v59
    %88 = vmatpush.msra.mxu0 %v58
    %89 = vmatpush.msra.mxu0 %v57
    %90 = vmatpush.msra.mxu0 %v56
    %91 = vmatpush.msra.mxu0 %v55
    %92 = vmatpush.msra.mxu0 %v54
    %93 = vmatpush.msra.mxu0 %v53
    %94 = vmatpush.msra.mxu0 %v52
    %95 = vmatpush.msra.mxu0 %v51
    %96 = vmatpush.msra.mxu0 %v50
    %97 = vmatpush.msra.mxu0 %v49
    %98 = vmatpush.msra.mxu0 %v48
    %99 = vmatpush.msra.mxu0 %v47
    %100 = vmatpush.msra.mxu0 %v46
    %101 = vmatmul.f32.gmra.mxu0 %v44
    %v102 = vpop.f32.mrf.mxu0
    %v103 = vadd.f32 %v75, %v102
    %104 = vdwg.mxu0
    %105 = vmatpush.msra.mxu0 0.0
    %106 = vmatpush.msra.mxu0 0.0
    %107 = vmatpush.msra.mxu0 0.0
    %108 = vmatpush.msra.mxu0 0.0
    %109 = vmatpush.msra.mxu0 0.0
    %110 = vmatpush.msra.mxu0 %v83
    %111 = vmatpush.msra.mxu0 %v71
    %112 = vmatpush.msra.mxu0 %v70
    %113 = vmatpush.msra.mxu0 %v69
    %114 = vmatpush.msra.mxu0 %v68
    %115 = vmatpush.msra.mxu0 %v67
    %116 = vmatpush.msra.mxu0 %v66
    %117 = vmatpush.msra.mxu0 %v65
    %118 = vmatpush.msra.mxu0 %v64
    %119 = vmatpush.msra.mxu0 %v63
    %120 = vmatpush.msra.mxu0 %v62
    %121 = vmatmul.f32.gmra.mxu0 %v79
    %v122 = vpop.f32.mrf.mxu0
    %v123 = vadd.f32 %v103, %v122
    %124 = vdwg.mxu0
    %v125 = vxor.u32 %v123, 2147483648
    %v126 = vmul.f32 %v125, 1.442695
    %v127 = vpow.pop %v126
    %v128 = vadd.f32 %v127, 1.0
    %v129 = vrcp.pop %v128
    %v130 = vmul.f32 %v128, %v129
    %v131 = vsub.f32 1.0, %v130
    %v132 = vmul.f32 %v129, %v131
    %v133 = vadd.f32 %v129, %v132
    %vm134 = vweird.f32 %v128
    %vm135 = vweird.f32 %v129
    %vm136 = vmor %vm134, %vm135
    %v137 = vsel %vm136, %v129, %v133
    %v138 = vand.u32 2147483647, %v128
    %vm139 = vcmp.eq.f32.partialorder %v138, 8.507059e+37
    %v140 = vand.u32 %v128, 2147483648
    %v141 = vor.u32 1.1754944e-38, %v140
    %v142 = vsel %vm139, %v141, %v137
    %v143 = vmul.f32 1.0, %v142
    %v144 = vlaneseq
    %v145 = vand.u32 %v144, 127
    %146 = vmax.xlane.f32.xlu0 %v143
    %v147 = vpop.xlane.xlu0 %146
    %vm148 = vcmp.eq.f32.partialorder %v143, %v147
    %v149 = vsel %vm148, %v145, 1073741824
    %v150 = vand.u32 %v149, 65535
    %v151 = vshra.s32 %v149, 16
    %v152 = vcvt.s32.f32 %v150
    %v153 = vcvt.s32.f32 %v151
    %154 = vmin.xlane.f32.xlu0 %v153
    %v155 = vpop.xlane.xlu0 %154
    %vm156 = vcmp.eq.f32.partialorder %v153, %v155
    %v157 = vsel %vm156, %v152, inf
    %158 = vmin.xlane.f32.xlu0 %v157
    %v159 = vpop.xlane.xlu0 %158
    %v160 = vcvt.f32.s32 %v159
    %v161 = vcvt.f32.s32 %v155
    %v162 = vshll.u32 %v161, 16
    %v163 = vadd.s32 %v162, %v160
    %vm164 = vcmp.eq.s32.totalorder %v145, %v163
    %v165 = vsel %vm164, -inf, %v143
    %166 = vmax.xlane.f32.xlu0 %v165
    %v167 = vpop.xlane.xlu0 %166
    %vm168 = vcmp.eq.f32.partialorder %v165, %v167
    %v169 = vsel %vm168, %v145, 1073741824
    %v170 = vand.u32 %v169, 65535
    %v171 = vshra.s32 %v169, 16
    %v172 = vcvt.s32.f32 %v170
    %v173 = vcvt.s32.f32 %v171
    %174 = vmin.xlane.f32.xlu0 %v173
    %v175 = vpop.xlane.xlu0 %174
    %vm176 = vcmp.eq.f32.partialorder %v173, %v175
    %v177 = vsel %vm176, %v172, inf
    %178 = vmin.xlane.f32.xlu0 %v177
    %v179 = vpop.xlane.xlu0 %178
    %v180 = vcvt.f32.s32 %v179
    %v181 = vcvt.f32.s32 %v175
    %v182 = vshll.u32 %v181, 16
    %v183 = vadd.s32 %v182, %v180
    %v184 = vadd.f32 %v147, %v167
    %v185 = vrcp.pop %v184
    %v186 = vmul.f32 %v184, %v185
    %v187 = vsub.f32 1.0, %v186
    %v188 = vmul.f32 %v185, %v187
    %v189 = vadd.f32 %v185, %v188
    %vm190 = vweird.f32 %v184
    %vm191 = vweird.f32 %v185
    %vm192 = vmor %vm190, %vm191
    %v193 = vsel %vm192, %v185, %v189
    %v194 = vand.u32 2147483647, %v184
    %vm195 = vcmp.eq.f32.partialorder %v194, 8.507059e+37
    %v196 = vand.u32 %v184, 2147483648
    %v197 = vor.u32 1.1754944e-38, %v196
    %v198 = vsel %vm195, %v197, %v193
    %v199 = vmul.f32 %v147, %v198
    %v200 = vmul.f32 %v167, %v198
    %vm201 = vcmp.eq.s32.totalorder %v145, 0
    %vm202 = vcmp.eq.s32.totalorder %v145, 1
    %vm203 = vcmp.eq.s32.totalorder %v145, 2
    %v204 = vcvt.s32.f32 %v163
    %v205 = vcvt.s32.f32 %v183
    %v206 = vsel %vm203, %v204, %v205
    %v207 = vsel %vm202, %v200, %v206
    %v208 = vsel %vm201, %v199, %v207
    %vm209 = vcmask 31744
    %210 = vst.msk [vmem:[%s3] sm:$0xff] %vm209, %v208
    // Predicated region
    $region22: #{gate_forward.1} parent=1 // pred_check
      _
    $region23: #{gate_forward.1} parent=1 // pred_check_branch
      %212 = sbr.rel (0) target = $region25
    $region24: #{gate_forward.1} parent=1 // pred_region
      _
    $region25: #{gate_forward.1} parent=1 // pred_fallthru
      _
    // Predicated region
    $region26: #{gate_forward.1} parent=1 // pred_check
      _
    $region27: #{gate_forward.1} parent=1 // pred_check_branch
      %214 = sbr.rel (0) target = $region29
    $region28: #{gate_forward.1} parent=1 // pred_region
      _
    $region29: #{gate_forward.1} parent=1 // pred_fallthru
      _
    %215 = vsyncpa [#allocation3], 1
    %216 = vsyncpa [#allocation5], 1

</llo_original>
